<compile_context>
chip_gen: v7x
topology: tpu7x:2x2x1
jax: 0.10.0
libtpu: 0.0.40
codegen_flags: <defaults>
</compile_context>

<pallas_src>
import jax
import jax.numpy as jnp
from jax.experimental import pallas as pl
from jax.experimental.pallas import tpu as pltpu


def _round_up(x, m):
    return ((x + m - 1) // m) * m


def _cdiv(a, b):
    return (a + b - 1) // b


def critic_kernel(xT_ref, w1T_ref, b1_ref, w3_ref, b3_ref, o_ref):
    # affine1 (transposed): (Hp, S) @ (S, tb) -> (Hp, tb) on the MXU, f32 acc.
    hT = jnp.dot(w1T_ref[...], xT_ref[...], preferred_element_type=jnp.float32)
    # bias + ReLU on the VPU; dropout (eval mode) is identity.
    # TODO(synk): train-mode dropout parity would need pltpu.prng_seed/prng_random_bits masking.
    hT = jnp.maximum(hT + b1_ref[...], 0.0)
    # affine3: (Hp, 1) weight column; reduce over the sublane (Hp) axis so the
    # XLU lane-reduce path is avoided and the result is a lane-dense row.
    out = jnp.sum(hT * w3_ref[...], axis=0, keepdims=True) + b3_ref[0]
    o_ref[...] = out.astype(o_ref.dtype)


def _choose_batch_tiling(batch, max_tb):
    """Lane-pad the batch and split it into an even number of 128-multiple
    tiles (even tile count feeds both TensorCores on v7x; no-op on v5e/v6e)."""
    max_tb = max(128, _round_up(max_tb, 128))
    bp = _round_up(max(batch, 1), 256)
    if bp <= 2 * max_tb:
        n_tiles = 2
        tb = bp // 2
    else:
        n_tiles = _cdiv(bp, max_tb)
        if n_tiles % 2:
            n_tiles += 1
        tb = _round_up(_cdiv(bp, n_tiles), 128)
        bp = tb * n_tiles
    return bp, tb, n_tiles


def critic_forward(x, w1, b1, w3, b3, *, max_block_b=8192, use_bf16=False):
    """Forward pass of CriticNetwork (the returned model1 branch).

    x:  (B, S) float32
    w1: (S, H), b1: (1, H)   -- affine1 stored as (in, out)
    w3: (H, 1), b3: (1, 1)   -- affine3
    returns (B, 1) float32
    """
    B, S = x.shape
    H = w1.shape[1]

    # --- parameter prep (tiny, one-time; ideally done once at load time) ---
    Hp = _round_up(H, 128)
    w1T = w1.T                       # (H, S): same layout as PyTorch affine1.weight
    b1c = b1.reshape(H, 1)
    w3c = w3.reshape(H, 1)
    if Hp != H:
        w1T = jnp.pad(w1T, ((0, Hp - H), (0, 0)))
        b1c = jnp.pad(b1c, ((0, Hp - H), (0, 0)))
        w3c = jnp.pad(w3c, ((0, Hp - H), (0, 0)))
    b3s = b3.reshape(1)              # true scalar -> SMEM

    # --- batch tiling ---
    Bp, tb, n_tiles = _choose_batch_tiling(B, max_block_b)

    # Transposed feed: xT is (S, B), so every HBM->VMEM DMA row is a dense
    # tb*4-byte stream and the VMEM block is exactly (S, tb) (no 16x lane
    # padding of a (tb, 8) block).  Ideally the producer hands us (S, B)
    # directly; here transpose + tail-pad fuse into one XLA copy.
    xT = x.T
    if Bp != B:
        xT = jnp.pad(xT, ((0, 0), (0, Bp - B)))
    if use_bf16:
        # bf16 MXU feed with f32 accumulation is valid on v5e/v6e/v7x.
        xT = xT.astype(jnp.bfloat16)
        w1T = w1T.astype(jnp.bfloat16)

    x_bytes = 2 if use_bf16 else 4
    cost = pl.CostEstimate(
        flops=2 * Bp * S * Hp + 4 * Bp * Hp,
        transcendentals=0,
        bytes_accessed=Bp * S * x_bytes + Hp * S * x_bytes + Hp * 8 + Bp * 4 + 4,
    )

    out = pl.pallas_call(
        critic_kernel,
        out_shape=jax.ShapeDtypeStruct((1, Bp), jnp.float32),
        grid=(n_tiles,),
        in_specs=[
            pl.BlockSpec((S, tb), lambda i: (0, i)),            # xT: tiled over batch
            pl.BlockSpec((Hp, S), lambda i: (0, 0)),            # W1^T: resident in VMEM
            pl.BlockSpec((Hp, 1), lambda i: (0, 0)),            # b1:   resident
            pl.BlockSpec((Hp, 1), lambda i: (0, 0)),            # w3:   resident
            pl.BlockSpec(memory_space=pltpu.MemorySpace.SMEM),  # b3 scalar in SMEM
        ],
        out_specs=pl.BlockSpec((1, tb), lambda i: (0, i)),      # lane-dense output row
        compiler_params=pltpu.CompilerParams(
            # v7x has 2 TensorCores: shard the (even-count) batch grid.
            dimension_semantics=("parallel",),
        ),
        cost_estimate=cost,
    )(xT, w1T, b1c, w3c, b3s)

    # Padded batch columns hold ReLU(b1).w3 + b3 garbage; slice them off.
    return out[0, :B].reshape(B, 1)


def init_params(key, state_space, hidden_dim):
    """Deterministic PyTorch-style uniform(-1/sqrt(fan_in), 1/sqrt(fan_in)) init."""
    k1, k2, k3, k4 = jax.random.split(key, 4)
    bound1 = 1.0 / jnp.sqrt(jnp.float32(state_space))
    bound3 = 1.0 / jnp.sqrt(jnp.float32(hidden_dim))
    # stored as (in, out) -> transpose of PyTorch's (out, in) layout
    w1 = jax.random.uniform(k1, (state_space, hidden_dim), jnp.float32, -bound1, bound1)
    b1 = jax.random.uniform(k2, (1, hidden_dim), jnp.float32, -bound1, bound1)
    w3 = jax.random.uniform(k3, (hidden_dim, 1), jnp.float32, -bound3, bound3)
    b3 = jax.random.uniform(k4, (1, 1), jnp.float32, -bound3, bound3)
    # affine2 exists in the PyTorch module but is unused by the returned output.
    return w1, b1, w3, b3


def reference_forward(x, w1, b1, w3, b3):
    h = jnp.maximum(x @ w1 + b1, 0.0)
    return h @ w3 + b3


if __name__ == "__main__":
    # Small shapes consistent with the module (env obs dim -> 8, hidden 32).
    batch, state_space, hidden_dim = 2, 8, 32
    key = jax.random.PRNGKey(0)
    kx, kp = jax.random.split(key)
    x = jax.random.normal(kx, (batch, state_space), jnp.float32)
    params = init_params(kp, state_space, hidden_dim)

    out = jax.block_until_ready(critic_forward(x, *params))
    ref = reference_forward(x, *params)
    assert out.shape == (batch, 1)
    assert jnp.allclose(out, ref, atol=1e-4, rtol=1e-4)

    # Exercise a multi-tile grid, odd batch size, and hidden-dim padding
    # (H=100 is the PyTorch default) with a small max tile so several even-
    # count grid steps actually run.
    b2, s2, h2 = 1037, 8, 100
    k1, k2 = jax.random.split(jax.random.PRNGKey(1))
    x2 = jax.random.normal(k1, (b2, s2), jnp.float32)
    p2 = init_params(k2, s2, h2)
    out2 = jax.block_until_ready(critic_forward(x2, *p2, max_block_b=256))
    ref2 = reference_forward(x2, *p2)
    assert out2.shape == (b2, 1)
    assert jnp.allclose(out2, ref2, atol=1e-4, rtol=1e-4)

    # bf16 MXU feed path (f32 accumulation kept), looser tolerance.
    out3 = jax.block_until_ready(critic_forward(x2, *p2, use_bf16=True))
    assert out3.shape == (b2, 1)
    assert jnp.allclose(out3, ref2, atol=5e-2, rtol=5e-2)

    print("KERNEL_OK")
</pallas_src>

<mosaic_0001>
module attributes {stable_mosaic.version = 11 : i64} {
  func.func @critic_kernel(%arg0: i32, %arg1: memref<8x128xf32, #tpu.memory_space<vmem>>, %arg2: memref<128x8xf32, #tpu.memory_space<vmem>>, %arg3: memref<128x1xf32, #tpu.memory_space<vmem>>, %arg4: memref<128x1xf32, #tpu.memory_space<vmem>>, %arg5: memref<1xf32, #tpu.memory_space<smem>>, %arg6: memref<1x128xf32, #tpu.memory_space<vmem>>) attributes {dimension_semantics = [#tpu.dimension_semantics<parallel>], iteration_bounds = array<i64: 2>, scalar_prefetch = 0 : i64, scratch_operands = 0 : i64, tpu.core_type = #tpu.core_type<tc>, window_params = [{transform_indices = @transform_0, window_bounds = array<i64: 8, 128>}, {pipeline_mode = #tpu.pipeline_mode<synchronous>, transform_indices = @transform_1, window_bounds = array<i64: 128, 8>}, {pipeline_mode = #tpu.pipeline_mode<synchronous>, transform_indices = @transform_2, window_bounds = array<i64: 128, 1>}, {pipeline_mode = #tpu.pipeline_mode<synchronous>, transform_indices = @transform_3, window_bounds = array<i64: 128, 1>}, {transform_indices = @transform_4, window_bounds = array<i64: 1>}, {transform_indices = @transform_5, window_bounds = array<i64: 1, 128>}]} {
    %c0 = arith.constant 0 : index
    %c0_0 = arith.constant 0 : index
    %0 = vector.load %arg2[%c0, %c0_0] : memref<128x8xf32, #tpu.memory_space<vmem>>, vector<128x8xf32>
    %c0_1 = arith.constant 0 : index
    %c0_2 = arith.constant 0 : index
    %1 = vector.load %arg1[%c0_1, %c0_2] : memref<8x128xf32, #tpu.memory_space<vmem>>, vector<8x128xf32>
    %cst = arith.constant dense<0.000000e+00> : vector<128x128xf32>
    %2 = tpu.matmul %0, %1, %cst {dimension_numbers = #tpu.dot_dimension_numbers<[1], [0], [0], [1], [0, 0, 1, 1], [], []>} : vector<128x8xf32>, vector<8x128xf32>, vector<128x128xf32> -> vector<128x128xf32>
    %c0_3 = arith.constant 0 : index
    %c0_4 = arith.constant 0 : index
    %3 = vector.load %arg3[%c0_3, %c0_4] : memref<128x1xf32, #tpu.memory_space<vmem>>, vector<128x1xf32>
    %4 = vector.broadcast %3 : vector<128x1xf32> to vector<128x128xf32>
    %5 = arith.addf %2, %4 : vector<128x128xf32>
    %cst_5 = arith.constant 0.000000e+00 : f32
    %6 = vector.broadcast %cst_5 : f32 to vector<128x128xf32>
    %7 = arith.maximumf %5, %6 : vector<128x128xf32>
    %c0_6 = arith.constant 0 : index
    %c0_7 = arith.constant 0 : index
    %8 = vector.load %arg4[%c0_6, %c0_7] : memref<128x1xf32, #tpu.memory_space<vmem>>, vector<128x1xf32>
    %9 = vector.broadcast %8 : vector<128x1xf32> to vector<128x128xf32>
    %10 = arith.mulf %7, %9 : vector<128x128xf32>
    %cst_8 = arith.constant dense<0.000000e+00> : vector<128xf32>
    %11 = vector.multi_reduction <add>, %10, %cst_8 [0] : vector<128x128xf32> to vector<128xf32>
    %12 = vector.shape_cast %11 : vector<128xf32> to vector<1x128xf32>
    %c0_9 = arith.constant 0 : index
    %13 = memref.load %arg5[%c0_9] : memref<1xf32, #tpu.memory_space<smem>>
    %14 = vector.broadcast %13 : f32 to vector<1x128xf32>
    %15 = arith.addf %12, %14 : vector<1x128xf32>
    %c0_10 = arith.constant 0 : index
    %c0_11 = arith.constant 0 : index
    %16 = vector.load %arg6[%c0_10, %c0_11] : memref<1x128xf32, #tpu.memory_space<vmem>>, vector<1x128xf32>
    tpu.vector_store %arg6[%c0_10, %c0_11], %15 {strides = array<i32>} : memref<1x128xf32, #tpu.memory_space<vmem>>, vector<1x128xf32>,
    return
  }
  func.func @transform_0(%arg0: i32) -> (i32, i32) {
    %c0_i32 = arith.constant 0 : i32
    %c0_i32_0 = arith.constant 0 : i32
    return %c0_i32, %arg0 : i32, i32
  }
  func.func @transform_1(%arg0: i32) -> (i32, i32) {
    %c0_i32 = arith.constant 0 : i32
    %c0_i32_0 = arith.constant 0 : i32
    %c0_i32_1 = arith.constant 0 : i32
    return %c0_i32, %c0_i32_0 : i32, i32
  }
  func.func @transform_2(%arg0: i32) -> (i32, i32) {
    %c0_i32 = arith.constant 0 : i32
    %c0_i32_0 = arith.constant 0 : i32
    %c0_i32_1 = arith.constant 0 : i32
    return %c0_i32, %c0_i32_0 : i32, i32
  }
  func.func @transform_3(%arg0: i32) -> (i32, i32) {
    %c0_i32 = arith.constant 0 : i32
    %c0_i32_0 = arith.constant 0 : i32
    %c0_i32_1 = arith.constant 0 : i32
    return %c0_i32, %c0_i32_0 : i32, i32
  }
  func.func @transform_4(%arg0: i32) -> i32 {
    %c0_i32 = arith.constant 0 : i32
    %c0_i32_0 = arith.constant 0 : i32
    return %c0_i32 : i32
  }
  func.func @transform_5(%arg0: i32) -> (i32, i32) {
    %c0_i32 = arith.constant 0 : i32
    %c0_i32_0 = arith.constant 0 : i32
    return %c0_i32, %arg0 : i32, i32
  }
}

</mosaic_0001>

<llo_original>
// kernel: tpu_custom_call.1
$region0: #{tpu_custom_call.1}
  #allocation0 [shape = 'u32[]', space=smem, size = 0x4, offset = 0x4, fixed_abs, tag = 'smem constant byte address 0x4 - core index']
  #allocation1 [shape = 'u32[144,128]{1,0:T(1,128)}', space=vmem, size = 0x12000, scoped, tag = 'internal scratch']
  #allocation2 [shape = 'f32[1]{0:T(128)S(6)}', space=smem, size = 0x200, scoped, tag = 'scoped memory for tpu_custom_call.1']
  %s0 = inlined_call_operand.vmem [shape: f32[8,256], index: 0, kind: input, shape index: {}]
  %s1 = inlined_call_operand.vmem [shape: f32[128,8], index: 1, kind: input, shape index: {}]
  %s2 = inlined_call_operand.vmem [shape: f32[128,1], index: 2, kind: input, shape index: {}]
  %s3 = inlined_call_operand.vmem [shape: f32[128,1], index: 3, kind: input, shape index: {}]
  %s4 = inlined_call_operand.<no memory space> [shape: f32[1], index: 4, kind: input, shape index: {}]
  %s5 = inlined_call_operand.hbm [shape: f32[1,256], index: 5, kind: output, shape index: {}]
  %s6 = sld [smem:[#allocation0]]
  $region53: #{tpu_custom_call.1} parent=0
    _
  %s8 = ssub.s32 1, %s6
  %s9 = scalar_select 0, %s8, %s6
  %10 = sst [smem:[#allocation2]] %s4
  $region1: #{tpu_custom_call.1} parent=0
    #allocation3 [shape = 'u8[1024]{0}', space=vmem, size = 0x400, scoped, tag = 'output window, operand 0']
    #allocation4 [shape = 's32[2]{0}', space=sflag, size = 0x8, scoped, tag = 'scoped memory for tpu_custom_call.1']
    %11 = vsyncpa [#allocation4], 0
    %s12 = scalar_lea.sflag [#allocation4], 1
    %13 = vsyncpa %s12, 0
    loop: start=0, step=1, limit=4
    $region2: #{tpu_custom_call.1} parent=1 // loop_pre_header
      _
    $region3: #{tpu_custom_call.1} parent=1 // loop_header
      %s15 = sphi 0, %s19
      %p16 = scmp.ge.s32.totalorder %s15, 4
      %s25 = sphi 0, %s27
      %s28 = sphi 0, %s25
      %s29 = sphi 0, %s28
      %s45 = sphi 0, %s29
      %s49 = sphi 0, %s49
      %s51 = sphi 0, %s49
      %s52 = sphi 0, %s51
      %s66 = sphi 0, %s52
      %s70 = sphi 0, %s70
      %s72 = sphi 0, %s70
      %s73 = sphi 0, %s72
      %s87 = sphi 0, %s73
      %s91 = sphi 0, %s91
      %s93 = sphi 0, %s91
      %s94 = sphi 0, %s93
      %s108 = sphi 0, %s94
      %s112 = sphi 0, %s112
      %s114 = sphi 0, %s112
      %s115 = sphi 0, %s114
      %s129 = sphi 0, %s115
      %s135 = sphi 0, %s137
      %s138 = sphi 0, %s135
      %s139 = sphi 0, %s138
      %s155 = sphi 0, %s139
    $region4: #{tpu_custom_call.1} parent=1 // loop_header_branch
      %18 = sbr.rel (%p16) target = $region8
    $region5: #{tpu_custom_call.1} parent=1 // loop_body
      %s20 = ssub.s32 %s15, 1
      %s21 = ssub.s32 %s15, 2
      %s22 = sadd.s32 %s15, 1
      %s23 = ssub.s32 %s15, %s22
      %p24 = scmp.eq.s32.totalorder %s23, 0
      %s26 = sadd.s32 %s25, 1
      %s27 = scalar_select %p24, %s25, %s26
      %p30 = pneg %p24
      %p31 = scmp.eq.s32.totalorder %s15, 1
      %p32 = por %p30, %p31
      %p33 = scmp.ne.s32.totalorder %s25, %s28
      %p34 = scmp.eq.s32.totalorder %s15, 0
      %p35 = por %p33, %p34
      %p36 = scmp.ne.s32.totalorder %s25, %s28
      %p37 = scmp.eq.s32.totalorder %s20, 1
      %p38 = por %p36, %p37
      %p39 = scmp.ne.s32.totalorder %s28, %s29
      %p40 = scmp.eq.s32.totalorder %s20, 0
      %p41 = por %p39, %p40
      %p42 = scmp.ne.s32.totalorder %s28, %s29
      %p43 = scmp.eq.s32.totalorder %s21, 1
      %p44 = por %p42, %p43
      %p46 = scmp.ne.s32.totalorder %s29, %s45
      %p47 = scmp.eq.s32.totalorder %s21, 0
      %p48 = por %p46, %p47
      %s50 = sadd.s32 %s49, 1
      %p53 = scmp.eq.s32.totalorder %s15, 1
      %p54 = scmp.ne.s32.totalorder %s49, %s51
      %p55 = scmp.eq.s32.totalorder %s15, 0
      %p56 = por %p54, %p55
      %p57 = scmp.ne.s32.totalorder %s49, %s51
      %p58 = scmp.eq.s32.totalorder %s20, 1
      %p59 = por %p57, %p58
      %p60 = scmp.ne.s32.totalorder %s51, %s52
      %p61 = scmp.eq.s32.totalorder %s20, 0
      %p62 = por %p60, %p61
      %p63 = scmp.ne.s32.totalorder %s51, %s52
      %p64 = scmp.eq.s32.totalorder %s21, 1
      %p65 = por %p63, %p64
      %p67 = scmp.ne.s32.totalorder %s52, %s66
      %p68 = scmp.eq.s32.totalorder %s21, 0
      %p69 = por %p67, %p68
      %s71 = sadd.s32 %s70, 1
      %p74 = scmp.eq.s32.totalorder %s15, 1
      %p75 = scmp.ne.s32.totalorder %s70, %s72
      %p76 = scmp.eq.s32.totalorder %s15, 0
      %p77 = por %p75, %p76
      %p78 = scmp.ne.s32.totalorder %s70, %s72
      %p79 = scmp.eq.s32.totalorder %s20, 1
      %p80 = por %p78, %p79
      %p81 = scmp.ne.s32.totalorder %s72, %s73
      %p82 = scmp.eq.s32.totalorder %s20, 0
      %p83 = por %p81, %p82
      %p84 = scmp.ne.s32.totalorder %s72, %s73
      %p85 = scmp.eq.s32.totalorder %s21, 1
      %p86 = por %p84, %p85
      %p88 = scmp.ne.s32.totalorder %s73, %s87
      %p89 = scmp.eq.s32.totalorder %s21, 0
      %p90 = por %p88, %p89
      %s92 = sadd.s32 %s91, 1
      %p95 = scmp.eq.s32.totalorder %s15, 1
      %p96 = scmp.ne.s32.totalorder %s91, %s93
      %p97 = scmp.eq.s32.totalorder %s15, 0
      %p98 = por %p96, %p97
      %p99 = scmp.ne.s32.totalorder %s91, %s93
      %p100 = scmp.eq.s32.totalorder %s20, 1
      %p101 = por %p99, %p100
      %p102 = scmp.ne.s32.totalorder %s93, %s94
      %p103 = scmp.eq.s32.totalorder %s20, 0
      %p104 = por %p102, %p103
      %p105 = scmp.ne.s32.totalorder %s93, %s94
      %p106 = scmp.eq.s32.totalorder %s21, 1
      %p107 = por %p105, %p106
      %p109 = scmp.ne.s32.totalorder %s94, %s108
      %p110 = scmp.eq.s32.totalorder %s21, 0
      %p111 = por %p109, %p110
      %s113 = sadd.s32 %s112, 1
      %p116 = scmp.eq.s32.totalorder %s15, 1
      %p117 = scmp.ne.s32.totalorder %s112, %s114
      %p118 = scmp.eq.s32.totalorder %s15, 0
      %p119 = por %p117, %p118
      %p120 = scmp.ne.s32.totalorder %s112, %s114
      %p121 = scmp.eq.s32.totalorder %s20, 1
      %p122 = por %p120, %p121
      %p123 = scmp.ne.s32.totalorder %s114, %s115
      %p124 = scmp.eq.s32.totalorder %s20, 0
      %p125 = por %p123, %p124
      %p126 = scmp.ne.s32.totalorder %s114, %s115
      %p127 = scmp.eq.s32.totalorder %s21, 1
      %p128 = por %p126, %p127
      %p130 = scmp.ne.s32.totalorder %s115, %s129
      %p131 = scmp.eq.s32.totalorder %s21, 0
      %p132 = por %p130, %p131
      %s133 = ssub.s32 %s15, %s22
      %p134 = scmp.eq.s32.totalorder %s133, 0
      %s136 = sadd.s32 %s135, 1
      %s137 = scalar_select %p134, %s135, %s136
      %p140 = pneg %p134
      %p141 = scmp.eq.s32.totalorder %s15, 1
      %p142 = por %p140, %p141
      %p143 = scmp.ne.s32.totalorder %s135, %s138
      %p144 = scmp.eq.s32.totalorder %s15, 0
      %p145 = por %p143, %p144
      %p146 = scmp.ne.s32.totalorder %s135, %s138
      %p147 = scmp.eq.s32.totalorder %s20, 1
      %p148 = por %p146, %p147
      %p149 = scmp.ne.s32.totalorder %s138, %s139
      %p150 = scmp.eq.s32.totalorder %s20, 0
      %p151 = por %p149, %p150
      %p152 = scmp.ne.s32.totalorder %s138, %s139
      %p153 = scmp.eq.s32.totalorder %s21, 1
      %p154 = por %p152, %p153
      %p156 = scmp.ne.s32.totalorder %s139, %s155
      %p157 = scmp.eq.s32.totalorder %s21, 0
      %p158 = por %p156, %p157
      %p159 = scmp.le.s32.totalorder 1, %s15
      %p160 = scmp.lt.s32.totalorder %s15, 3
      %p161 = pnand %p159, %p160
      %p162 = pneg %p161
      // Predicated region
      $region9: #{tpu_custom_call.1} parent=5 // pred_check
        _
      $region10: #{tpu_custom_call.1} parent=5 // pred_check_branch
        %164 = sbr.rel (%p161) target = $region12
      $region11: #{tpu_custom_call.1} parent=5 // pred_region
        %s165 = ssub.s32 %s15, 1
        // Predicated region
        $region13: #{tpu_custom_call.1} parent=11 // pred_check
          %p166 = pneg %p62
        $region14: #{tpu_custom_call.1} parent=11 // pred_check_branch
          %168 = sbr.rel (%p166) target = $region16
        $region15: #{tpu_custom_call.1} parent=11 // pred_region
          _
        $region16: #{tpu_custom_call.1} parent=11 // pred_fallthru
          _
        // Predicated region
        $region17: #{tpu_custom_call.1} parent=11 // pred_check
          %p169 = pneg %p83
        $region18: #{tpu_custom_call.1} parent=11 // pred_check_branch
          %171 = sbr.rel (%p169) target = $region20
        $region19: #{tpu_custom_call.1} parent=11 // pred_region
          _
        $region20: #{tpu_custom_call.1} parent=11 // pred_fallthru
          _
        // Predicated region
        $region21: #{tpu_custom_call.1} parent=11 // pred_check
          %p172 = pneg %p104
        $region22: #{tpu_custom_call.1} parent=11 // pred_check_branch
          %174 = sbr.rel (%p172) target = $region24
        $region23: #{tpu_custom_call.1} parent=11 // pred_region
          _
        $region24: #{tpu_custom_call.1} parent=11 // pred_fallthru
          _
        // Predicated region
        $region25: #{tpu_custom_call.1} parent=11 // pred_check
          %p175 = pneg %p125
        $region26: #{tpu_custom_call.1} parent=11 // pred_check_branch
          %177 = sbr.rel (%p175) target = $region28
        $region27: #{tpu_custom_call.1} parent=11 // pred_region
          _
        $region28: #{tpu_custom_call.1} parent=11 // pred_fallthru
          _
      $region12: #{tpu_custom_call.1} parent=5 // pred_fallthru
        _
      %p178 = scmp.lt.s32.totalorder %s15, 2
      // Predicated region
      $region29: #{tpu_custom_call.1} parent=5 // pred_check
        %p179 = pneg %p178
      $region30: #{tpu_custom_call.1} parent=5 // pred_check_branch
        %181 = sbr.rel (%p179) target = $region32
      $region31: #{tpu_custom_call.1} parent=5 // pred_region
        // Predicated region
        $region33: #{tpu_custom_call.1} parent=31 // pred_check
          %p182 = pneg %p35
        $region34: #{tpu_custom_call.1} parent=31 // pred_check_branch
          %184 = sbr.rel (%p182) target = $region36
        $region35: #{tpu_custom_call.1} parent=31 // pred_region
          %p185 = scmp.lt.s32.totalorder %s15, 1
          %s186 = scalar_select %p185, %s15, 1
          %s187 = smul.addr %s186, 8
          %s188 = scalar_lea.vmem %s0, %s187
        $region36: #{tpu_custom_call.1} parent=31 // pred_fallthru
          _
      $region32: #{tpu_custom_call.1} parent=5 // pred_fallthru
        _
      %p189 = scmp.le.s32.totalorder 1, %s15
      %p190 = scmp.lt.s32.totalorder %s15, 3
      %p191 = pnand %p189, %p190
      %p192 = pneg %p191
      // Predicated region
      $region37: #{tpu_custom_call.1} parent=5 // pred_check
        _
      $region38: #{tpu_custom_call.1} parent=5 // pred_check_branch
        %194 = sbr.rel (%p191) target = $region40
      $region39: #{tpu_custom_call.1} parent=5 // pred_region
        %s195 = ssub.s32 %s15, 1
        %p196 = scmp.lt.s32.totalorder %s20, 1
        %s197 = scalar_select %p196, %s20, 1
        %s198 = smul.addr %s197, 8
        %s199 = scalar_lea.vmem %s0, %s198
        %p200 = pneg %p41
        %p201 = pneg %p38
        %p202 = pneg %p62
        %p203 = pneg %p59
        %p204 = pneg %p83
        %p205 = pneg %p80
        %p206 = pneg %p104
        %p207 = pneg %p101
        %p208 = pneg %p125
        %p209 = pneg %p122
        %p210 = pneg %p151
        %p211 = pneg %p148
        %s212 = sand.u32 %s138, 1
        %s213 = scalar_lea.sflag [#allocation4], %s212
        %s214 = sand.u32 %s138, 1
        %s215 = scalar_lea.vmem [#allocation3], %s214
        %p216 = scmp.lt.s32.totalorder %s20, 1
        %s217 = scalar_select %p216, %s20, 1
        %s218 = smul.addr %s217, 8
        %s219 = scalar_lea.vmem %s0, %s218
        %v220 = vld [vmem:[%s1] sm:$0xff]
        %v221 = vld [vmem:[%s1 + $0x8] sm:$0xff]
        %v222 = vld [vmem:[%s1 + $0x10] sm:$0xff]
        %v223 = vld [vmem:[%s1 + $0x18] sm:$0xff]
        %v224 = vld [vmem:[%s1 + $0x20] sm:$0xff]
        %v225 = vld [vmem:[%s1 + $0x28] sm:$0xff]
        %v226 = vld [vmem:[%s1 + $0x30] sm:$0xff]
        %v227 = vld [vmem:[%s1 + $0x38] sm:$0xff]
        %v228 = vld [vmem:[%s1 + $0x40] sm:$0xff]
        %v229 = vld [vmem:[%s1 + $0x48] sm:$0xff]
        %v230 = vld [vmem:[%s1 + $0x50] sm:$0xff]
        %v231 = vld [vmem:[%s1 + $0x58] sm:$0xff]
        %v232 = vld [vmem:[%s1 + $0x60] sm:$0xff]
        %v233 = vld [vmem:[%s1 + $0x68] sm:$0xff]
        %v234 = vld [vmem:[%s1 + $0x70] sm:$0xff]
        %v235 = vld [vmem:[%s1 + $0x78] sm:$0xff]
        %v236 = vld [vmem:[%s219] sm:$0xff]
        %v237 = vld [vmem:[%s2] sm:$0xff]
        %v238 = vld [vmem:[%s2 + $0x8] sm:$0xff]
        %v239 = vld [vmem:[%s2 + $0x10] sm:$0xff]
        %v240 = vld [vmem:[%s2 + $0x18] sm:$0xff]
        %v241 = vld [vmem:[%s2 + $0x20] sm:$0xff]
        %v242 = vld [vmem:[%s2 + $0x28] sm:$0xff]
        %v243 = vld [vmem:[%s2 + $0x30] sm:$0xff]
        %v244 = vld [vmem:[%s2 + $0x38] sm:$0xff]
        %v245 = vld [vmem:[%s2 + $0x40] sm:$0xff]
        %v246 = vld [vmem:[%s2 + $0x48] sm:$0xff]
        %v247 = vld [vmem:[%s2 + $0x50] sm:$0xff]
        %v248 = vld [vmem:[%s2 + $0x58] sm:$0xff]
        %v249 = vld [vmem:[%s2 + $0x60] sm:$0xff]
        %v250 = vld [vmem:[%s2 + $0x68] sm:$0xff]
        %v251 = vld [vmem:[%s2 + $0x70] sm:$0xff]
        %v252 = vld [vmem:[%s2 + $0x78] sm:$0xff]
        %254 = vset.pattern.permute.xlu0 0
        %255 = vperm.xlu0 %254, %v237
        %v256 = vpop.permute.xlu0 %255
        %259 = vset.pattern.permute.xlu0 0
        %260 = vperm.xlu0 %259, %v238
        %v261 = vpop.permute.xlu0 %260
        %264 = vset.pattern.permute.xlu0 0
        %265 = vperm.xlu0 %264, %v239
        %v266 = vpop.permute.xlu0 %265
        %269 = vset.pattern.permute.xlu0 0
        %270 = vperm.xlu0 %269, %v240
        %v271 = vpop.permute.xlu0 %270
        %274 = vset.pattern.permute.xlu0 0
        %275 = vperm.xlu0 %274, %v241
        %v276 = vpop.permute.xlu0 %275
        %279 = vset.pattern.permute.xlu0 0
        %280 = vperm.xlu0 %279, %v242
        %v281 = vpop.permute.xlu0 %280
        %284 = vset.pattern.permute.xlu0 0
        %285 = vperm.xlu0 %284, %v243
        %v286 = vpop.permute.xlu0 %285
        %289 = vset.pattern.permute.xlu0 0
        %290 = vperm.xlu0 %289, %v244
        %v291 = vpop.permute.xlu0 %290
        %294 = vset.pattern.permute.xlu0 0
        %295 = vperm.xlu0 %294, %v245
        %v296 = vpop.permute.xlu0 %295
        %299 = vset.pattern.permute.xlu0 0
        %300 = vperm.xlu0 %299, %v246
        %v301 = vpop.permute.xlu0 %300
        %304 = vset.pattern.permute.xlu0 0
        %305 = vperm.xlu0 %304, %v247
        %v306 = vpop.permute.xlu0 %305
        %309 = vset.pattern.permute.xlu0 0
        %310 = vperm.xlu0 %309, %v248
        %v311 = vpop.permute.xlu0 %310
        %314 = vset.pattern.permute.xlu0 0
        %315 = vperm.xlu0 %314, %v249
        %v316 = vpop.permute.xlu0 %315
        %319 = vset.pattern.permute.xlu0 0
        %320 = vperm.xlu0 %319, %v250
        %v321 = vpop.permute.xlu0 %320
        %324 = vset.pattern.permute.xlu0 0
        %325 = vperm.xlu0 %324, %v251
        %v326 = vpop.permute.xlu0 %325
        %329 = vset.pattern.permute.xlu0 0
        %330 = vperm.xlu0 %329, %v252
        %v331 = vpop.permute.xlu0 %330
        %vm333 = vcmask 64512
        %v335 = vsel %vm333, %v220, 0
        %v338 = vsel %vm333, %v221, 0
        %v341 = vsel %vm333, %v222, 0
        %v344 = vsel %vm333, %v223, 0
        %v347 = vsel %vm333, %v224, 0
        %v350 = vsel %vm333, %v225, 0
        %v353 = vsel %vm333, %v226, 0
        %v356 = vsel %vm333, %v227, 0
        %v359 = vsel %vm333, %v228, 0
        %v362 = vsel %vm333, %v229, 0
        %v365 = vsel %vm333, %v230, 0
        %v368 = vsel %vm333, %v231, 0
        %v371 = vsel %vm333, %v232, 0
        %v374 = vsel %vm333, %v233, 0
        %v377 = vsel %vm333, %v234, 0
        %v380 = vsel %vm333, %v235, 0
        %382 = vmatprep.subr.mxu0 0.0
        %383 = vmatpush1.msra.mxu0 %v236
        %384 = vmatprep.subr.mxu0 0.0
        %385 = vmatpush1.msra.mxu0 0.0
        %386 = vmatprep.subr.mxu0 0.0
        %387 = vmatpush1.msra.mxu0 0.0
        %388 = vmatprep.subr.mxu0 0.0
        %389 = vmatpush1.msra.mxu0 0.0
        %390 = vmatprep.subr.mxu0 0.0
        %391 = vmatpush1.msra.mxu0 0.0
        %392 = vmatprep.subr.mxu0 0.0
        %393 = vmatpush1.msra.mxu0 0.0
        %394 = vmatprep.subr.mxu0 0.0
        %395 = vmatpush1.msra.mxu0 0.0
        %396 = vmatprep.subr.mxu0 0.0
        %397 = vmatpush1.msra.mxu0 0.0
        %398 = vmatprep.subr.mxu0 0.0
        %399 = vmatpush1.msra.mxu0 0.0
        %400 = vmatprep.subr.mxu0 0.0
        %401 = vmatpush1.msra.mxu0 0.0
        %402 = vmatprep.subr.mxu0 0.0
        %403 = vmatpush1.msra.mxu0 0.0
        %404 = vmatprep.subr.mxu0 0.0
        %405 = vmatpush1.msra.mxu0 0.0
        %406 = vmatprep.subr.mxu0 0.0
        %407 = vmatpush1.msra.mxu0 0.0
        %408 = vmatprep.subr.mxu0 0.0
        %409 = vmatpush1.msra.mxu0 0.0
        %410 = vmatprep.subr.mxu0 0.0
        %411 = vmatpush1.msra.mxu0 0.0
        %412 = vmatprep.subr.mxu0 0.0
        %413 = vmatpush1.msra.mxu0 0.0
        %414 = vmatprep.subr.mxu0 0.0
        %415 = vmatpush1.msra.mxu0 0.0
        %416 = vmatprep.subr.mxu0 0.0
        %417 = vmatpush1.msra.mxu0 0.0
        %418 = vmatprep.subr.mxu0 0.0
        %419 = vmatpush1.msra.mxu0 0.0
        %420 = vmatprep.subr.mxu0 0.0
        %421 = vmatpush1.msra.mxu0 0.0
        %422 = vmatprep.subr.mxu0 0.0
        %423 = vmatpush1.msra.mxu0 0.0
        %424 = vmatprep.subr.mxu0 0.0
        %425 = vmatpush1.msra.mxu0 0.0
        %426 = vmatprep.subr.mxu0 0.0
        %427 = vmatpush1.msra.mxu0 0.0
        %428 = vmatprep.subr.mxu0 0.0
        %429 = vmatpush1.msra.mxu0 0.0
        %430 = vmatprep.subr.mxu0 0.0
        %431 = vmatpush1.msra.mxu0 0.0
        %432 = vmatprep.subr.mxu0 0.0
        %433 = vmatpush1.msra.mxu0 0.0
        %434 = vmatprep.subr.mxu0 0.0
        %435 = vmatpush1.msra.mxu0 0.0
        %436 = vmatprep.subr.mxu0 0.0
        %437 = vmatpush1.msra.mxu0 0.0
        %438 = vmatprep.subr.mxu0 0.0
        %439 = vmatpush1.msra.mxu0 0.0
        %440 = vmatprep.subr.mxu0 0.0
        %441 = vmatpush1.msra.mxu0 0.0
        %442 = vmatprep.subr.mxu0 0.0
        %443 = vmatpush1.msra.mxu0 0.0
        %444 = vmatprep.subr.mxu0 0.0
        %445 = vmatpush1.msra.mxu0 0.0
        %446 = vmatprep.mubr.f32.mxu0 0.0
        %447 = vmatmul.mubr.f32.gmra.mrb[0].mxu0 %v335
        %v448 = vpop.f32.mrb[0].mxu0
        %v449 = vadd.f32 %v256, %v448
        %v450 = vpop.f32.mrb[0].mxu0
        %451 = vmatprep.mubr.f32.mxu0 0.0
        %452 = vmatmul.mubr.f32.gmra.mrb[0].mxu0 %v338
        %v453 = vpop.f32.mrb[0].mxu0
        %v454 = vadd.f32 %v261, %v453
        %v455 = vpop.f32.mrb[0].mxu0
        %456 = vmatprep.mubr.f32.mxu0 0.0
        %457 = vmatmul.mubr.f32.gmra.mrb[0].mxu0 %v341
        %v458 = vpop.f32.mrb[0].mxu0
        %v459 = vadd.f32 %v266, %v458
        %v460 = vpop.f32.mrb[0].mxu0
        %461 = vmatprep.mubr.f32.mxu0 0.0
        %462 = vmatmul.mubr.f32.gmra.mrb[0].mxu0 %v344
        %v463 = vpop.f32.mrb[0].mxu0
        %v464 = vadd.f32 %v271, %v463
        %v465 = vpop.f32.mrb[0].mxu0
        %466 = vmatprep.mubr.f32.mxu0 0.0
        %467 = vmatmul.mubr.f32.gmra.mrb[0].mxu0 %v347
        %v468 = vpop.f32.mrb[0].mxu0
        %v469 = vadd.f32 %v276, %v468
        %v470 = vpop.f32.mrb[0].mxu0
        %471 = vmatprep.mubr.f32.mxu0 0.0
        %472 = vmatmul.mubr.f32.gmra.mrb[0].mxu0 %v350
        %v473 = vpop.f32.mrb[0].mxu0
        %v474 = vadd.f32 %v281, %v473
        %v475 = vpop.f32.mrb[0].mxu0
        %476 = vmatprep.mubr.f32.mxu0 0.0
        %477 = vmatmul.mubr.f32.gmra.mrb[0].mxu0 %v353
        %v478 = vpop.f32.mrb[0].mxu0
        %v479 = vadd.f32 %v286, %v478
        %v480 = vpop.f32.mrb[0].mxu0
        %481 = vmatprep.mubr.f32.mxu0 0.0
        %482 = vmatmul.mubr.f32.gmra.mrb[0].mxu0 %v356
        %v483 = vpop.f32.mrb[0].mxu0
        %v484 = vadd.f32 %v291, %v483
        %v485 = vpop.f32.mrb[0].mxu0
        %486 = vmatprep.mubr.f32.mxu0 0.0
        %487 = vmatmul.mubr.f32.gmra.mrb[0].mxu0 %v359
        %v488 = vpop.f32.mrb[0].mxu0
        %v489 = vadd.f32 %v296, %v488
        %v490 = vpop.f32.mrb[0].mxu0
        %491 = vmatprep.mubr.f32.mxu0 0.0
        %492 = vmatmul.mubr.f32.gmra.mrb[0].mxu0 %v362
        %v493 = vpop.f32.mrb[0].mxu0
        %v494 = vadd.f32 %v301, %v493
        %v495 = vpop.f32.mrb[0].mxu0
        %496 = vmatprep.mubr.f32.mxu0 0.0
        %497 = vmatmul.mubr.f32.gmra.mrb[0].mxu0 %v365
        %v498 = vpop.f32.mrb[0].mxu0
        %v499 = vadd.f32 %v306, %v498
        %v500 = vpop.f32.mrb[0].mxu0
        %501 = vmatprep.mubr.f32.mxu0 0.0
        %502 = vmatmul.mubr.f32.gmra.mrb[0].mxu0 %v368
        %v503 = vpop.f32.mrb[0].mxu0
        %v504 = vadd.f32 %v311, %v503
        %v505 = vpop.f32.mrb[0].mxu0
        %506 = vmatprep.mubr.f32.mxu0 0.0
        %507 = vmatmul.mubr.f32.gmra.mrb[0].mxu0 %v371
        %v508 = vpop.f32.mrb[0].mxu0
        %v509 = vadd.f32 %v316, %v508
        %v510 = vpop.f32.mrb[0].mxu0
        %511 = vmatprep.mubr.f32.mxu0 0.0
        %512 = vmatmul.mubr.f32.gmra.mrb[0].mxu0 %v374
        %v513 = vpop.f32.mrb[0].mxu0
        %v514 = vadd.f32 %v321, %v513
        %v515 = vpop.f32.mrb[0].mxu0
        %516 = vmatprep.mubr.f32.mxu0 0.0
        %517 = vmatmul.mubr.f32.gmra.mrb[0].mxu0 %v377
        %v518 = vpop.f32.mrb[0].mxu0
        %v519 = vadd.f32 %v326, %v518
        %v520 = vpop.f32.mrb[0].mxu0
        %521 = vmatprep.mubr.f32.mxu0 0.0
        %522 = vmatmul.mubr.f32.gmra.mrb[0].mxu0 %v380
        %v523 = vpop.f32.mrb[0].mxu0
        %v524 = vadd.f32 %v331, %v523
        %v525 = vpop.f32.mrb[0].mxu0
        %526 = vdwg.mxu0
        %v527 = vmax.f32 %v449, 0.0
        %v528 = vmax.f32 %v454, 0.0
        %v529 = vmax.f32 %v459, 0.0
        %v530 = vmax.f32 %v464, 0.0
        %v531 = vmax.f32 %v469, 0.0
        %v532 = vmax.f32 %v474, 0.0
        %v533 = vmax.f32 %v479, 0.0
        %v534 = vmax.f32 %v484, 0.0
        %v535 = vmax.f32 %v489, 0.0
        %v536 = vmax.f32 %v494, 0.0
        %v537 = vmax.f32 %v499, 0.0
        %v538 = vmax.f32 %v504, 0.0
        %v539 = vmax.f32 %v509, 0.0
        %v540 = vmax.f32 %v514, 0.0
        %v541 = vmax.f32 %v519, 0.0
        %v542 = vmax.f32 %v524, 0.0
        %v543 = vld [vmem:[%s3] sm:$0xff]
        %v544 = vld [vmem:[%s3 + $0x8] sm:$0xff]
        %v545 = vld [vmem:[%s3 + $0x10] sm:$0xff]
        %v546 = vld [vmem:[%s3 + $0x18] sm:$0xff]
        %v547 = vld [vmem:[%s3 + $0x20] sm:$0xff]
        %v548 = vld [vmem:[%s3 + $0x28] sm:$0xff]
        %v549 = vld [vmem:[%s3 + $0x30] sm:$0xff]
        %v550 = vld [vmem:[%s3 + $0x38] sm:$0xff]
        %v551 = vld [vmem:[%s3 + $0x40] sm:$0xff]
        %v552 = vld [vmem:[%s3 + $0x48] sm:$0xff]
        %v553 = vld [vmem:[%s3 + $0x50] sm:$0xff]
        %v554 = vld [vmem:[%s3 + $0x58] sm:$0xff]
        %v555 = vld [vmem:[%s3 + $0x60] sm:$0xff]
        %v556 = vld [vmem:[%s3 + $0x68] sm:$0xff]
        %v557 = vld [vmem:[%s3 + $0x70] sm:$0xff]
        %v558 = vld [vmem:[%s3 + $0x78] sm:$0xff]
        %560 = vset.pattern.permute.xlu0 0
        %561 = vperm.xlu0 %560, %v543
        %v562 = vpop.permute.xlu0 %561
        %565 = vset.pattern.permute.xlu0 0
        %566 = vperm.xlu0 %565, %v544
        %v567 = vpop.permute.xlu0 %566
        %570 = vset.pattern.permute.xlu0 0
        %571 = vperm.xlu0 %570, %v545
        %v572 = vpop.permute.xlu0 %571
        %575 = vset.pattern.permute.xlu0 0
        %576 = vperm.xlu0 %575, %v546
        %v577 = vpop.permute.xlu0 %576
        %580 = vset.pattern.permute.xlu0 0
        %581 = vperm.xlu0 %580, %v547
        %v582 = vpop.permute.xlu0 %581
        %585 = vset.pattern.permute.xlu0 0
        %586 = vperm.xlu0 %585, %v548
        %v587 = vpop.permute.xlu0 %586
        %590 = vset.pattern.permute.xlu0 0
        %591 = vperm.xlu0 %590, %v549
        %v592 = vpop.permute.xlu0 %591
        %595 = vset.pattern.permute.xlu0 0
        %596 = vperm.xlu0 %595, %v550
        %v597 = vpop.permute.xlu0 %596
        %600 = vset.pattern.permute.xlu0 0
        %601 = vperm.xlu0 %600, %v551
        %v602 = vpop.permute.xlu0 %601
        %605 = vset.pattern.permute.xlu0 0
        %606 = vperm.xlu0 %605, %v552
        %v607 = vpop.permute.xlu0 %606
        %610 = vset.pattern.permute.xlu0 0
        %611 = vperm.xlu0 %610, %v553
        %v612 = vpop.permute.xlu0 %611
        %615 = vset.pattern.permute.xlu0 0
        %616 = vperm.xlu0 %615, %v554
        %v617 = vpop.permute.xlu0 %616
        %620 = vset.pattern.permute.xlu0 0
        %621 = vperm.xlu0 %620, %v555
        %v622 = vpop.permute.xlu0 %621
        %625 = vset.pattern.permute.xlu0 0
        %626 = vperm.xlu0 %625, %v556
        %v627 = vpop.permute.xlu0 %626
        %630 = vset.pattern.permute.xlu0 0
        %631 = vperm.xlu0 %630, %v557
        %v632 = vpop.permute.xlu0 %631
        %635 = vset.pattern.permute.xlu0 0
        %636 = vperm.xlu0 %635, %v558
        %v637 = vpop.permute.xlu0 %636
        %v639 = vmul.f32 %v527, %v562
        %v640 = vmul.f32 %v528, %v567
        %v641 = vmul.f32 %v529, %v572
        %v642 = vmul.f32 %v530, %v577
        %v643 = vmul.f32 %v531, %v582
        %v644 = vmul.f32 %v532, %v587
        %v645 = vmul.f32 %v533, %v592
        %v646 = vmul.f32 %v534, %v597
        %v647 = vmul.f32 %v535, %v602
        %v648 = vmul.f32 %v536, %v607
        %v649 = vmul.f32 %v537, %v612
        %v650 = vmul.f32 %v538, %v617
        %v651 = vmul.f32 %v539, %v622
        %v652 = vmul.f32 %v540, %v627
        %v653 = vmul.f32 %v541, %v632
        %v654 = vmul.f32 %v542, %v637
        %v655 = vadd.f32 %v639, %v640
        %v656 = vadd.f32 %v655, %v641
        %v657 = vadd.f32 %v656, %v642
        %v658 = vadd.f32 %v657, %v643
        %v659 = vadd.f32 %v658, %v644
        %v660 = vadd.f32 %v659, %v645
        %v661 = vadd.f32 %v660, %v646
        %v662 = vadd.f32 %v661, %v647
        %v663 = vadd.f32 %v662, %v648
        %v664 = vadd.f32 %v663, %v649
        %v665 = vadd.f32 %v664, %v650
        %v666 = vadd.f32 %v665, %v651
        %v667 = vadd.f32 %v666, %v652
        %v668 = vadd.f32 %v667, %v653
        %v669 = vadd.f32 %v668, %v654
        %v670 = vrot.slane %v669, 4
        %v671 = vadd.f32 %v669, %v670
        %v672 = vrot.slane %v671, 2
        %v673 = vadd.f32 %v671, %v672
        %v674 = vrot.slane %v673, 1
        %v675 = vadd.f32 %v673, %v674
        %s676 = sld [smem:[#allocation2]]
        %v677 = vstv %s676
        %v678 = vadd.f32 %v675, %v677
        %679 = vst [vmem:[%s215] sm:$0x1] %v678
        %s680 = sand.u32 %s138, 1
        %s681 = scalar_lea.sflag [#allocation4], %s680
        %s682 = sand.u32 %s138, 1
        %s683 = scalar_lea.vmem [#allocation3], %s682
        // Predicated region
        $region41: #{tpu_custom_call.1} parent=39 // pred_check
          %p684 = pneg %p148
        $region42: #{tpu_custom_call.1} parent=39 // pred_check_branch
          %686 = sbr.rel (%p684) target = $region44
        $region43: #{tpu_custom_call.1} parent=39 // pred_region
          %s688 = ssub.s32 16, 16
          %689 = vsyncadd %s681, %s688
          %s690 = smul.addr %s20, 16
          %s691 = scalar_lea.hbm %s5, %s690
          %s693 = sshll.u32 %s683, 4
          %s694 = int_to_ptr.vmem [resolvable:$true] %s693
          %696 = dma.vmem_to_hbm [thread:$0]  %s694, 16, %s691, %s681
        $region44: #{tpu_custom_call.1} parent=39 // pred_fallthru
          _
      $region40: #{tpu_custom_call.1} parent=5 // pred_fallthru
        _
      %p697 = scmp.le.s32.totalorder 2, %s15
      // Predicated region
      $region45: #{tpu_custom_call.1} parent=5 // pred_check
        %p698 = pneg %p697
      $region46: #{tpu_custom_call.1} parent=5 // pred_check_branch
        %700 = sbr.rel (%p698) target = $region48
      $region47: #{tpu_custom_call.1} parent=5 // pred_region
        %s701 = ssub.s32 %s15, 2
        // Predicated region
        $region49: #{tpu_custom_call.1} parent=47 // pred_check
          %p702 = pneg %p154
        $region50: #{tpu_custom_call.1} parent=47 // pred_check_branch
          %704 = sbr.rel (%p702) target = $region52
        $region51: #{tpu_custom_call.1} parent=47 // pred_region
          %s705 = sand.u32 %s139, 1
          %s706 = scalar_lea.sflag [#allocation4], %s705
          %s707 = sand.u32 %s139, 1
          %s708 = scalar_lea.vmem [#allocation3], %s707
          %709 = dma.done %s706, 16
        $region52: #{tpu_custom_call.1} parent=47 // pred_fallthru
          _
      $region48: #{tpu_custom_call.1} parent=5 // pred_fallthru
        _
    $region6: #{tpu_custom_call.1} parent=1 // loop_footer
      %s19 = sadd.s32 1, %s15
    $region7: #{tpu_custom_call.1} parent=1 // loop_footer_branch
      %14 = sbr.rel target = $region3
    $region8: #{tpu_custom_call.1} parent=1 // loop_exit
      _
    %710 = vsyncpa [#allocation4], 1
    %s711 = scalar_lea.sflag [#allocation4], 1
    %712 = vsyncpa %s711, 1

</llo_original>
